<compile_context>
chip_gen: v6e
topology: v6e:2x2x1
jax: 0.10.0
libtpu: 0.0.40
codegen_flags: <defaults>
</compile_context>

<pallas_src>
import functools
import math

import jax
import jax.numpy as jnp
from jax.experimental import pallas as pl
from jax.experimental.pallas import tpu as pltpu

EMB = 2                 # embedding dim, fixed by fc1 = nn.Linear(2, n_classes)
EMB_PAD = 8             # narrow lane padding for w_emb / accumulator
TB_MAX = 1024           # batch tile cap
TK_MAX = 4096           # feature (reduction) tile cap
B_ALIGN = 16            # bf16-safe sublane multiple for the batch dim
OUT_TILE_BUDGET = 16 * 1024 * 1024   # bytes for the double-buffered output tile (v7x guard)
W_RESIDENT_BYTES = 2 * 1024 * 1024   # keep w_emb fully VMEM-resident below this size


def _round_up(x, m):
    return (x + m - 1) // m * m


def _cdiv(a, b):
    return (a + b - 1) // b


def classification_kernel(n_classes, tk, w_resident,
                          alpha_ref, x_ref, w_emb_ref, b_emb_ref,
                          w_fc1_ref, b_fc1_ref, out_ref, acc_ref):
    k = pl.program_id(1)

    # --- accumulator init (P3) ----------------------------------------------
    @pl.when(k == 0)
    def _():
        acc_ref[...] = jnp.zeros_like(acc_ref)

    # --- embedding_net: Linear(D, 2), lane-padded to EMB_PAD=8 ---------------
    if w_resident:
        # Whole w_emb lives in VMEM (constant block index -> fetched once);
        # slice the current K chunk out of it.
        off = pl.multiple_of(k * tk, 128)
        w_blk = w_emb_ref[pl.ds(off, tk), :]
    else:
        w_blk = w_emb_ref[...]

    # bf16 inputs, f32 accumulate. Padded weight columns are zero -> inert.
    acc_ref[...] += jnp.dot(x_ref[...], w_blk,
                            preferred_element_type=jnp.float32)   # [TB, EMB_PAD]

    # --- finalize: bias + PReLU + fc1 + log_softmax, once per batch tile -----
    @pl.when(k == pl.num_programs(1) - 1)
    def _():
        emb = acc_ref[...] + b_emb_ref[...]                       # [TB, EMB_PAD] f32
        a = alpha_ref[0, 0]                                       # shared PReLU alpha (SMEM)
        act = jnp.where(emb >= 0.0, emb, a * emb)                 # nn.PReLU()

        # fc1: Linear(2, n_classes). K=2 is MXU-hostile; two VPU broadcast-FMAs.
        logits = (act[:, 0:1] * w_fc1_ref[0:1, :]
                  + act[:, 1:2] * w_fc1_ref[1:2, :]
                  + b_fc1_ref[...])                               # [TB, C_PAD]

        # Mask lane-padding columns so they don't perturb the normalizer.
        col = jax.lax.broadcasted_iota(jnp.int32, logits.shape, 1)
        logits = jnp.where(col < n_classes, logits, -jnp.inf)

        # F.log_softmax(..., dim=-1), numerically stable.
        m = jnp.max(logits, axis=-1, keepdims=True)
        shifted = logits - m
        lse = jnp.log(jnp.sum(jnp.exp(shifted), axis=-1, keepdims=True))
        out_ref[...] = shifted - lse


def classification_net_forward(x_nchw, params):
    """x_nchw: [B, C, H, W] float32. Returns log-softmax scores [B, n_classes]."""
    w_emb, b_emb, alpha, w_fc1, b_fc1 = params
    B = x_nchw.shape[0]
    D = math.prod(x_nchw.shape[1:])
    n_classes = w_fc1.shape[1]
    C_PAD = _round_up(n_classes, 128)

    # --- tile selection -------------------------------------------------------
    # v7x guard: keep the (TB, C_PAD) f32 output tile (double-buffered) bounded.
    tb_cap_out = max(B_ALIGN,
                     (OUT_TILE_BUDGET // (2 * 4 * C_PAD)) // B_ALIGN * B_ALIGN)
    tb_max = min(TB_MAX, tb_cap_out)

    B_pad0 = _round_up(B, B_ALIGN)
    n_b = _cdiv(B_pad0, tb_max)
    if B_pad0 >= 2 * B_ALIGN:
        n_b = max(n_b, 2)            # v7x: give both TensorCores a batch tile
    TB = _round_up(_cdiv(B_pad0, n_b), B_ALIGN)
    n_b = _cdiv(B_pad0, TB)
    B_pad = n_b * TB

    D_pad0 = _round_up(D, 128)
    n_k = _cdiv(D_pad0, TK_MAX)
    TK = _round_up(_cdiv(D_pad0, n_k), 128)
    n_k = _cdiv(D_pad0, TK)
    D_pad = n_k * TK

    # Keep the (tiny) embedding weight fully VMEM-resident when it fits.
    w_resident = (D_pad * EMB_PAD * 2) <= W_RESIDENT_BYTES

    # --- pad operands to lane-dense, tile-divisible shapes --------------------
    # x / w_emb are streamed as bf16 (halves HBM bytes); accumulate stays f32.
    x = x_nchw.reshape(B, D).astype(jnp.bfloat16)
    x = jnp.pad(x, ((0, B_pad - B), (0, D_pad - D)))
    w_emb_p = jnp.pad(w_emb.astype(jnp.bfloat16),
                      ((0, D_pad - D), (0, EMB_PAD - EMB)))
    b_emb_p = jnp.pad(b_emb.astype(jnp.float32).reshape(1, EMB),
                      ((0, 0), (0, EMB_PAD - EMB)))
    w_fc1_p = jnp.pad(w_fc1.astype(jnp.float32),
                      ((0, 8 - EMB), (0, C_PAD - n_classes)))
    b_fc1_p = jnp.pad(b_fc1.astype(jnp.float32).reshape(1, n_classes),
                      ((0, 0), (0, C_PAD - n_classes)))
    alpha_p = alpha.astype(jnp.float32).reshape(1, 1)

    grid = (n_b, n_k)

    if w_resident:
        w_emb_spec = pl.BlockSpec((D_pad, EMB_PAD), lambda i, k: (0, 0))
    else:
        w_emb_spec = pl.BlockSpec((TK, EMB_PAD), lambda i, k: (k, 0))

    out_padded = pl.pallas_call(
        functools.partial(classification_kernel, n_classes, TK, w_resident),
        out_shape=jax.ShapeDtypeStruct((B_pad, C_PAD), jnp.float32),
        grid_spec=pltpu.PrefetchScalarGridSpec(
            num_scalar_prefetch=0,
            grid=grid,
            in_specs=[
                pl.BlockSpec(memory_space=pltpu.MemorySpace.SMEM),   # alpha scalar
                pl.BlockSpec((TB, TK), lambda i, k: (i, k)),         # x tile (bf16)
                w_emb_spec,                                          # w_emb (bf16)
                pl.BlockSpec((1, EMB_PAD), lambda i, k: (0, 0)),     # b_emb
                pl.BlockSpec((8, C_PAD), lambda i, k: (0, 0)),       # w_fc1 (padded rows)
                pl.BlockSpec((1, C_PAD), lambda i, k: (0, 0)),       # b_fc1
            ],
            out_specs=pl.BlockSpec((TB, C_PAD), lambda i, k: (i, 0)),
            scratch_shapes=[pltpu.VMEM((TB, EMB_PAD), jnp.float32)],
        ),
        compiler_params=pltpu.CompilerParams(
            dimension_semantics=("parallel", "arbitrary"),
            # ~35 MiB worst-case working set with bf16 streaming; 48 MiB is
            # ample on v5e/v6e (128 MiB) and still within v7x's 64 MiB.
            vmem_limit_bytes=48 * 1024 * 1024,
        ),
    )(alpha_p, x, w_emb_p, b_emb_p, w_fc1_p, b_fc1_p)

    return out_padded[:B, :n_classes]


def init_params(key, in_features, n_classes):
    """Deterministic synthetic parameters (PyTorch-like uniform init)."""
    k1, k2, k3, k4 = jax.random.split(key, 4)
    bound_emb = 1.0 / jnp.sqrt(in_features)
    w_emb = jax.random.uniform(k1, (in_features, EMB), jnp.float32,
                               -bound_emb, bound_emb)
    b_emb = jax.random.uniform(k2, (1, EMB), jnp.float32,
                               -bound_emb, bound_emb)
    alpha = jnp.array([0.25], dtype=jnp.float32)  # nn.PReLU() default init
    bound_fc1 = 1.0 / jnp.sqrt(EMB)
    w_fc1 = jax.random.uniform(k3, (EMB, n_classes), jnp.float32,
                               -bound_fc1, bound_fc1)
    b_fc1 = jax.random.uniform(k4, (1, n_classes), jnp.float32,
                               -bound_fc1, bound_fc1)
    return w_emb, b_emb, alpha, w_fc1, b_fc1


if __name__ == "__main__":
    key = jax.random.PRNGKey(0)
    kx, kp = jax.random.split(key)

    B, C, H, W = 2, 4, 16, 16
    n_classes = 10
    D = C * H * W

    x = jax.random.normal(kx, (B, C, H, W), dtype=jnp.float32)
    params = init_params(kp, D, n_classes)

    scores = classification_net_forward(x, params)
    scores = jax.block_until_ready(scores)

    # Reference check in plain JAX (same math; inputs rounded to bf16 like the
    # kernel's streamed operands, accumulation in f32).
    w_emb, b_emb, alpha, w_fc1, b_fc1 = params
    xf = x.reshape(B, -1).astype(jnp.bfloat16).astype(jnp.float32)
    wf = w_emb.astype(jnp.bfloat16).astype(jnp.float32)
    emb = jnp.dot(xf, wf, precision=jax.lax.Precision.HIGHEST) + b_emb
    act = jnp.where(emb >= 0, emb, alpha[0] * emb)
    logits = jnp.dot(act, w_fc1, precision=jax.lax.Precision.HIGHEST) + b_fc1
    ref = jax.nn.log_softmax(logits, axis=-1)
    assert scores.shape == (B, n_classes)
    assert jnp.allclose(scores, ref, atol=1e-3, rtol=1e-3), "mismatch vs reference"

    print("KERNEL_OK")
</pallas_src>

<mosaic_0001>
module attributes {stable_mosaic.version = 11 : i64} {
  func.func @classification_kernel(%arg0: i32, %arg1: i32, %arg2: memref<1x1xf32, #tpu.memory_space<smem>>, %arg3: memref<16x1024xbf16, #tpu.memory_space<vmem>>, %arg4: memref<1024x8xbf16, #tpu.memory_space<vmem>>, %arg5: memref<1x8xf32, #tpu.memory_space<vmem>>, %arg6: memref<8x128xf32, #tpu.memory_space<vmem>>, %arg7: memref<1x128xf32, #tpu.memory_space<vmem>>, %arg8: memref<16x128xf32, #tpu.memory_space<vmem>>, %arg9: memref<16x8xf32, #tpu.memory_space<vmem>>) attributes {dimension_semantics = [#tpu.dimension_semantics<parallel>, #tpu.dimension_semantics<arbitrary>], iteration_bounds = array<i64: 1, 1>, scalar_prefetch = 0 : i64, scratch_operands = 1 : i64, tpu.core_type = #tpu.core_type<tc>, window_params = [{transform_indices = @transform_0, window_bounds = array<i64: 1, 1>}, {transform_indices = @transform_1, window_bounds = array<i64: 16, 1024>}, {pipeline_mode = #tpu.pipeline_mode<synchronous>, transform_indices = @transform_2, window_bounds = array<i64: 1024, 8>}, {pipeline_mode = #tpu.pipeline_mode<synchronous>, transform_indices = @transform_3, window_bounds = array<i64: 1, 8>}, {pipeline_mode = #tpu.pipeline_mode<synchronous>, transform_indices = @transform_4, window_bounds = array<i64: 8, 128>}, {pipeline_mode = #tpu.pipeline_mode<synchronous>, transform_indices = @transform_5, window_bounds = array<i64: 1, 128>}, {transform_indices = @transform_6, window_bounds = array<i64: 16, 128>}]} {
    %c0_i32 = arith.constant 0 : i32
    %0 = arith.cmpi eq, %arg1, %c0_i32 : i32
    %1 = arith.extui %0 : i1 to i32
    %c0_i32_0 = arith.constant 0 : i32
    %2 = arith.cmpi ne, %1, %c0_i32_0 : i32
    scf.if %2 {
      %cst_9 = arith.constant 0.000000e+00 : f32
      %15 = vector.broadcast %cst_9 : f32 to vector<16x8xf32>
      %c0_10 = arith.constant 0 : index
      %c0_11 = arith.constant 0 : index
      %16 = vector.load %arg9[%c0_10, %c0_11] : memref<16x8xf32, #tpu.memory_space<vmem>>, vector<16x8xf32>
      tpu.vector_store %arg9[%c0_10, %c0_11], %15 {strides = array<i32>} : memref<16x8xf32, #tpu.memory_space<vmem>>, vector<16x8xf32>,
    } else {
    }
    %c1024_i32 = arith.constant 1024 : i32
    %3 = arith.muli %arg1, %c1024_i32 : i32
    %4 = tpu.assume_multiple %3, 128 : i32
    %5 = arith.index_cast %4 : i32 to index
    %c0 = arith.constant 0 : index
    %6 = vector.load %arg4[%5, %c0] : memref<1024x8xbf16, #tpu.memory_space<vmem>>, vector<1024x8xbf16>
    %c0_1 = arith.constant 0 : index
    %c0_2 = arith.constant 0 : index
    %7 = vector.load %arg9[%c0_1, %c0_2] : memref<16x8xf32, #tpu.memory_space<vmem>>, vector<16x8xf32>
    %c0_3 = arith.constant 0 : index
    %c0_4 = arith.constant 0 : index
    %8 = vector.load %arg3[%c0_3, %c0_4] : memref<16x1024xbf16, #tpu.memory_space<vmem>>, vector<16x1024xbf16>
    %cst = arith.constant dense<0.000000e+00> : vector<16x8xf32>
    %9 = tpu.matmul %8, %6, %cst {dimension_numbers = #tpu.dot_dimension_numbers<[1], [0], [0], [1], [0, 0, 1, 1], [], []>} : vector<16x1024xbf16>, vector<1024x8xbf16>, vector<16x8xf32> -> vector<16x8xf32>
    %10 = arith.addf %7, %9 : vector<16x8xf32>
    %c0_5 = arith.constant 0 : index
    %c0_6 = arith.constant 0 : index
    %11 = vector.load %arg9[%c0_5, %c0_6] : memref<16x8xf32, #tpu.memory_space<vmem>>, vector<16x8xf32>
    tpu.vector_store %arg9[%c0_5, %c0_6], %10 {strides = array<i32>} : memref<16x8xf32, #tpu.memory_space<vmem>>, vector<16x8xf32>,
    %c0_i32_7 = arith.constant 0 : i32
    %12 = arith.cmpi eq, %arg1, %c0_i32_7 : i32
    %13 = arith.extui %12 : i1 to i32
    %c0_i32_8 = arith.constant 0 : i32
    %14 = arith.cmpi ne, %13, %c0_i32_8 : i32
    scf.if %14 {
      %c0_9 = arith.constant 0 : index
      %c0_10 = arith.constant 0 : index
      %15 = vector.load %arg9[%c0_9, %c0_10] : memref<16x8xf32, #tpu.memory_space<vmem>>, vector<16x8xf32>
      %c0_11 = arith.constant 0 : index
      %c0_12 = arith.constant 0 : index
      %16 = vector.load %arg5[%c0_11, %c0_12] : memref<1x8xf32, #tpu.memory_space<vmem>>, vector<1x8xf32>
      %17 = vector.broadcast %16 : vector<1x8xf32> to vector<16x8xf32>
      %18 = arith.addf %15, %17 : vector<16x8xf32>
      %c0_13 = arith.constant 0 : index
      %c0_14 = arith.constant 0 : index
      %19 = memref.load %arg2[%c0_13, %c0_14] : memref<1x1xf32, #tpu.memory_space<smem>>
      %cst_15 = arith.constant 0.000000e+00 : f32
      %20 = vector.broadcast %cst_15 : f32 to vector<16x8xf32>
      %21 = arith.cmpf oge, %18, %20 : vector<16x8xf32>
      %22 = vector.broadcast %19 : f32 to vector<16x8xf32>
      %23 = arith.mulf %22, %18 : vector<16x8xf32>
      %24 = arith.select %21, %18, %23 : vector<16x8xi1>, vector<16x8xf32>
      %25 = vector.extract_strided_slice %24 {offsets = [0, 0], sizes = [16, 1], strides = [1, 1]} : vector<16x8xf32> to vector<16x1xf32>
      %c0_16 = arith.constant 0 : index
      %c0_17 = arith.constant 0 : index
      %26 = vector.load %arg6[%c0_16, %c0_17] : memref<8x128xf32, #tpu.memory_space<vmem>>, vector<1x128xf32>
      %27 = vector.broadcast %25 : vector<16x1xf32> to vector<16x128xf32>
      %28 = vector.broadcast %26 : vector<1x128xf32> to vector<16x128xf32>
      %29 = arith.mulf %27, %28 : vector<16x128xf32>
      %30 = vector.extract_strided_slice %24 {offsets = [0, 1], sizes = [16, 1], strides = [1, 1]} : vector<16x8xf32> to vector<16x1xf32>
      %c1 = arith.constant 1 : index
      %c0_18 = arith.constant 0 : index
      %31 = vector.load %arg6[%c1, %c0_18] : memref<8x128xf32, #tpu.memory_space<vmem>>, vector<1x128xf32>
      %32 = vector.broadcast %30 : vector<16x1xf32> to vector<16x128xf32>
      %33 = vector.broadcast %31 : vector<1x128xf32> to vector<16x128xf32>
      %34 = arith.mulf %32, %33 : vector<16x128xf32>
      %35 = arith.addf %29, %34 : vector<16x128xf32>
      %c0_19 = arith.constant 0 : index
      %c0_20 = arith.constant 0 : index
      %36 = vector.load %arg7[%c0_19, %c0_20] : memref<1x128xf32, #tpu.memory_space<vmem>>, vector<1x128xf32>
      %37 = vector.broadcast %36 : vector<1x128xf32> to vector<16x128xf32>
      %38 = arith.addf %35, %37 : vector<16x128xf32>
      %39 = tpu.iota {dimensions = array<i32: 1>} : vector<16x128xi32>
      %c10_i32 = arith.constant 10 : i32
      %40 = vector.broadcast %c10_i32 : i32 to vector<16x128xi32>
      %41 = arith.cmpi slt, %39, %40 : vector<16x128xi32>
      %cst_21 = arith.constant 0xFF800000 : f32
      %42 = vector.broadcast %cst_21 : f32 to vector<16x128xf32>
      %43 = arith.select %41, %38, %42 : vector<16x128xi1>, vector<16x128xf32>
      %cst_22 = arith.constant dense<0xFF800000> : vector<16xf32>
      %44 = vector.multi_reduction <maximumf>, %43, %cst_22 [1] : vector<16x128xf32> to vector<16xf32>
      %45 = vector.shape_cast %44 : vector<16xf32> to vector<16x1xf32>
      %46 = vector.broadcast %45 : vector<16x1xf32> to vector<16x128xf32>
      %47 = arith.subf %43, %46 : vector<16x128xf32>
      %48 = math.exp %47 : vector<16x128xf32>
      %cst_23 = arith.constant dense<0.000000e+00> : vector<16xf32>
      %49 = vector.multi_reduction <add>, %48, %cst_23 [1] : vector<16x128xf32> to vector<16xf32>
      %50 = vector.shape_cast %49 : vector<16xf32> to vector<16x1xf32>
      %51 = math.log %50 : vector<16x1xf32>
      %52 = vector.broadcast %51 : vector<16x1xf32> to vector<16x128xf32>
      %53 = arith.subf %47, %52 : vector<16x128xf32>
      %c0_24 = arith.constant 0 : index
      %c0_25 = arith.constant 0 : index
      %54 = vector.load %arg8[%c0_24, %c0_25] : memref<16x128xf32, #tpu.memory_space<vmem>>, vector<16x128xf32>
      tpu.vector_store %arg8[%c0_24, %c0_25], %53 {strides = array<i32>} : memref<16x128xf32, #tpu.memory_space<vmem>>, vector<16x128xf32>,
    } else {
    }
    return
  }
  func.func @transform_0(%arg0: i32, %arg1: i32) -> (i32, i32) {
    %c0_i32 = arith.constant 0 : i32
    %c0_i32_0 = arith.constant 0 : i32
    %c0_i32_1 = arith.constant 0 : i32
    return %c0_i32, %c0_i32_0 : i32, i32
  }
  func.func @transform_1(%arg0: i32, %arg1: i32) -> (i32, i32) {
    %c0_i32 = arith.constant 0 : i32
    return %arg0, %arg1 : i32, i32
  }
  func.func @transform_2(%arg0: i32, %arg1: i32) -> (i32, i32) {
    %c0_i32 = arith.constant 0 : i32
    %c0_i32_0 = arith.constant 0 : i32
    %c0_i32_1 = arith.constant 0 : i32
    return %c0_i32, %c0_i32_0 : i32, i32
  }
  func.func @transform_3(%arg0: i32, %arg1: i32) -> (i32, i32) {
    %c0_i32 = arith.constant 0 : i32
    %c0_i32_0 = arith.constant 0 : i32
    %c0_i32_1 = arith.constant 0 : i32
    return %c0_i32, %c0_i32_0 : i32, i32
  }
  func.func @transform_4(%arg0: i32, %arg1: i32) -> (i32, i32) {
    %c0_i32 = arith.constant 0 : i32
    %c0_i32_0 = arith.constant 0 : i32
    %c0_i32_1 = arith.constant 0 : i32
    return %c0_i32, %c0_i32_0 : i32, i32
  }
  func.func @transform_5(%arg0: i32, %arg1: i32) -> (i32, i32) {
    %c0_i32 = arith.constant 0 : i32
    %c0_i32_0 = arith.constant 0 : i32
    %c0_i32_1 = arith.constant 0 : i32
    return %c0_i32, %c0_i32_0 : i32, i32
  }
  func.func @transform_6(%arg0: i32, %arg1: i32) -> (i32, i32) {
    %c0_i32 = arith.constant 0 : i32
    %c0_i32_0 = arith.constant 0 : i32
    return %arg0, %c0_i32 : i32, i32
  }
}

</mosaic_0001>

<llo_original>
// kernel: tpu_custom_call.1
$region0: #{tpu_custom_call.1}
  #allocation0 [shape = 'u32[]', space=smem, size = 0x4, offset = 0x4, fixed_abs, tag = 'smem constant byte address 0x4 - core index']
  #allocation1 [shape = 'u32[144,128]{1,0:T(1,128)}', space=vmem, size = 0x12000, scoped, tag = 'internal scratch']
  #allocation2 [shape = 'f32[16,8]{1,0:T(8,128)}', space=vmem, size = 0x2000, scoped, tag = 'scratch operand']
  #allocation3 [shape = 'f32[1,1]{1,0:T(1,128)S(6)}', space=smem, size = 0x200, scoped, tag = 'scoped memory for tpu_custom_call.1']
  %s0 = inlined_call_operand.<no memory space> [shape: f32[1,1], index: 0, kind: input, shape index: {}]
  %s1 = inlined_call_operand.vmem [shape: bf16[16,1024], index: 1, kind: input, shape index: {}]
  %s2 = inlined_call_operand.vmem [shape: bf16[1024,8], index: 2, kind: input, shape index: {}]
  %s3 = inlined_call_operand.vmem [shape: f32[1,8], index: 3, kind: input, shape index: {}]
  %s4 = inlined_call_operand.vmem [shape: f32[8,128], index: 4, kind: input, shape index: {}]
  %s5 = inlined_call_operand.vmem [shape: f32[1,128], index: 5, kind: input, shape index: {}]
  %s6 = inlined_call_operand.hbm [shape: f32[16,128], index: 6, kind: output, shape index: {}]
  %s7 = sld [smem:[#allocation0]]
  $region42: #{tpu_custom_call.1} parent=0
    _
  %s9 = ssub.s32 1, %s7
  %s10 = scalar_select 0, %s9, %s7
  %11 = sst [smem:[#allocation3]] %s0
  $region1: #{tpu_custom_call.1} parent=0
    #allocation4 [shape = 'u8[8192]{0}', space=vmem, size = 0x2000, scoped, tag = 'output window, operand 0, single buffered']
    #allocation5 [shape = 's32[1]{0}', space=sflag, size = 0x4, scoped, tag = 'scoped memory for tpu_custom_call.1']
    %12 = vsyncpa [#allocation5], 0
    // Predicated region
    $region2: #{tpu_custom_call.1} parent=1 // pred_check
      _
    $region3: #{tpu_custom_call.1} parent=1 // pred_check_branch
      %14 = sbr.rel (0) target = $region5
    $region4: #{tpu_custom_call.1} parent=1 // pred_region
      _
    $region5: #{tpu_custom_call.1} parent=1 // pred_fallthru
      _
    // Predicated region
    $region6: #{tpu_custom_call.1} parent=1 // pred_check
      _
    $region7: #{tpu_custom_call.1} parent=1 // pred_check_branch
      %16 = sbr.rel (0) target = $region9
    $region8: #{tpu_custom_call.1} parent=1 // pred_region
      _
    $region9: #{tpu_custom_call.1} parent=1 // pred_fallthru
      _
    // Predicated region
    $region10: #{tpu_custom_call.1} parent=1 // pred_check
      _
    $region11: #{tpu_custom_call.1} parent=1 // pred_check_branch
      %18 = sbr.rel (0) target = $region13
    $region12: #{tpu_custom_call.1} parent=1 // pred_region
      _
    $region13: #{tpu_custom_call.1} parent=1 // pred_fallthru
      _
    // Predicated region
    $region14: #{tpu_custom_call.1} parent=1 // pred_check
      _
    $region15: #{tpu_custom_call.1} parent=1 // pred_check_branch
      %20 = sbr.rel (0) target = $region17
    $region16: #{tpu_custom_call.1} parent=1 // pred_region
      _
    $region17: #{tpu_custom_call.1} parent=1 // pred_fallthru
      _
    // Predicated region
    $region18: #{tpu_custom_call.1} parent=1 // pred_check
      _
    $region19: #{tpu_custom_call.1} parent=1 // pred_check_branch
      %22 = sbr.rel (0) target = $region21
    $region20: #{tpu_custom_call.1} parent=1 // pred_region
      _
    $region21: #{tpu_custom_call.1} parent=1 // pred_fallthru
      _
    // Predicated region
    $region22: #{tpu_custom_call.1} parent=1 // pred_check
      _
    $region23: #{tpu_custom_call.1} parent=1 // pred_check_branch
      %24 = sbr.rel (0) target = $region25
    $region24: #{tpu_custom_call.1} parent=1 // pred_region
      _
    $region25: #{tpu_custom_call.1} parent=1 // pred_fallthru
      _
    %p26 = scmp.eq.s32.totalorder 0, 0
    // Predicated region
    $region26: #{tpu_custom_call.1} parent=1 // pred_check
      %p27 = pneg %p26
    $region27: #{tpu_custom_call.1} parent=1 // pred_check_branch
      %29 = sbr.rel (%p27) target = $region29
    $region28: #{tpu_custom_call.1} parent=1 // pred_region
      %vm30 = vcmask 64512
      %31 = vst.msk [vmem:[#allocation2] sm:$0xff] %vm30, 0.0
      %32 = vst.msk [vmem:[#allocation2 + $0x8] sm:$0xff] %vm30, 0.0
    $region29: #{tpu_custom_call.1} parent=1 // pred_fallthru
      _
    %s33 = smul.u32 0, 1024
    %s34 = sshra.s32 %s33, 3
    %s35 = sand.u32 %s33, 7
    %s36 = smul.addr %s34, 4
    %s37 = scalar_lea.vmem %s2, %s36
    %v38 = vld [vmem:[%s37] sm:$0xf]
    %v39 = vld [vmem:[%s37 + $0x4] sm:$0xf]
    %v40 = vld [vmem:[%s37 + $0x8] sm:$0xf]
    %v41 = vld [vmem:[%s37 + $0xc] sm:$0xf]
    %v42 = vld [vmem:[%s37 + $0x10] sm:$0xf]
    %v43 = vld [vmem:[%s37 + $0x14] sm:$0xf]
    %v44 = vld [vmem:[%s37 + $0x18] sm:$0xf]
    %v45 = vld [vmem:[%s37 + $0x1c] sm:$0xf]
    %v46 = vld [vmem:[%s37 + $0x20] sm:$0xf]
    %v47 = vld [vmem:[%s37 + $0x24] sm:$0xf]
    %v48 = vld [vmem:[%s37 + $0x28] sm:$0xf]
    %v49 = vld [vmem:[%s37 + $0x2c] sm:$0xf]
    %v50 = vld [vmem:[%s37 + $0x30] sm:$0xf]
    %v51 = vld [vmem:[%s37 + $0x34] sm:$0xf]
    %v52 = vld [vmem:[%s37 + $0x38] sm:$0xf]
    %v53 = vld [vmem:[%s37 + $0x3c] sm:$0xf]
    %v54 = vld [vmem:[%s37 + $0x40] sm:$0xf]
    %v55 = vld [vmem:[%s37 + $0x44] sm:$0xf]
    %v56 = vld [vmem:[%s37 + $0x48] sm:$0xf]
    %v57 = vld [vmem:[%s37 + $0x4c] sm:$0xf]
    %v58 = vld [vmem:[%s37 + $0x50] sm:$0xf]
    %v59 = vld [vmem:[%s37 + $0x54] sm:$0xf]
    %v60 = vld [vmem:[%s37 + $0x58] sm:$0xf]
    %v61 = vld [vmem:[%s37 + $0x5c] sm:$0xf]
    %v62 = vld [vmem:[%s37 + $0x60] sm:$0xf]
    %v63 = vld [vmem:[%s37 + $0x64] sm:$0xf]
    %v64 = vld [vmem:[%s37 + $0x68] sm:$0xf]
    %v65 = vld [vmem:[%s37 + $0x6c] sm:$0xf]
    %v66 = vld [vmem:[%s37 + $0x70] sm:$0xf]
    %v67 = vld [vmem:[%s37 + $0x74] sm:$0xf]
    %v68 = vld [vmem:[%s37 + $0x78] sm:$0xf]
    %v69 = vld [vmem:[%s37 + $0x7c] sm:$0xf]
    %v70 = vld [vmem:[%s37 + $0x80] sm:$0xf]
    %v71 = vld [vmem:[%s37 + $0x84] sm:$0xf]
    %v72 = vld [vmem:[%s37 + $0x88] sm:$0xf]
    %v73 = vld [vmem:[%s37 + $0x8c] sm:$0xf]
    %v74 = vld [vmem:[%s37 + $0x90] sm:$0xf]
    %v75 = vld [vmem:[%s37 + $0x94] sm:$0xf]
    %v76 = vld [vmem:[%s37 + $0x98] sm:$0xf]
    %v77 = vld [vmem:[%s37 + $0x9c] sm:$0xf]
    %v78 = vld [vmem:[%s37 + $0xa0] sm:$0xf]
    %v79 = vld [vmem:[%s37 + $0xa4] sm:$0xf]
    %v80 = vld [vmem:[%s37 + $0xa8] sm:$0xf]
    %v81 = vld [vmem:[%s37 + $0xac] sm:$0xf]
    %v82 = vld [vmem:[%s37 + $0xb0] sm:$0xf]
    %v83 = vld [vmem:[%s37 + $0xb4] sm:$0xf]
    %v84 = vld [vmem:[%s37 + $0xb8] sm:$0xf]
    %v85 = vld [vmem:[%s37 + $0xbc] sm:$0xf]
    %v86 = vld [vmem:[%s37 + $0xc0] sm:$0xf]
    %v87 = vld [vmem:[%s37 + $0xc4] sm:$0xf]
    %v88 = vld [vmem:[%s37 + $0xc8] sm:$0xf]
    %v89 = vld [vmem:[%s37 + $0xcc] sm:$0xf]
    %v90 = vld [vmem:[%s37 + $0xd0] sm:$0xf]
    %v91 = vld [vmem:[%s37 + $0xd4] sm:$0xf]
    %v92 = vld [vmem:[%s37 + $0xd8] sm:$0xf]
    %v93 = vld [vmem:[%s37 + $0xdc] sm:$0xf]
    %v94 = vld [vmem:[%s37 + $0xe0] sm:$0xf]
    %v95 = vld [vmem:[%s37 + $0xe4] sm:$0xf]
    %v96 = vld [vmem:[%s37 + $0xe8] sm:$0xf]
    %v97 = vld [vmem:[%s37 + $0xec] sm:$0xf]
    %v98 = vld [vmem:[%s37 + $0xf0] sm:$0xf]
    %v99 = vld [vmem:[%s37 + $0xf4] sm:$0xf]
    %v100 = vld [vmem:[%s37 + $0xf8] sm:$0xf]
    %v101 = vld [vmem:[%s37 + $0xfc] sm:$0xf]
    %v102 = vld [vmem:[%s37 + $0x100] sm:$0xf]
    %v103 = vld [vmem:[%s37 + $0x104] sm:$0xf]
    %v104 = vld [vmem:[%s37 + $0x108] sm:$0xf]
    %v105 = vld [vmem:[%s37 + $0x10c] sm:$0xf]
    %v106 = vld [vmem:[%s37 + $0x110] sm:$0xf]
    %v107 = vld [vmem:[%s37 + $0x114] sm:$0xf]
    %v108 = vld [vmem:[%s37 + $0x118] sm:$0xf]
    %v109 = vld [vmem:[%s37 + $0x11c] sm:$0xf]
    %v110 = vld [vmem:[%s37 + $0x120] sm:$0xf]
    %v111 = vld [vmem:[%s37 + $0x124] sm:$0xf]
    %v112 = vld [vmem:[%s37 + $0x128] sm:$0xf]
    %v113 = vld [vmem:[%s37 + $0x12c] sm:$0xf]
    %v114 = vld [vmem:[%s37 + $0x130] sm:$0xf]
    %v115 = vld [vmem:[%s37 + $0x134] sm:$0xf]
    %v116 = vld [vmem:[%s37 + $0x138] sm:$0xf]
    %v117 = vld [vmem:[%s37 + $0x13c] sm:$0xf]
    %v118 = vld [vmem:[%s37 + $0x140] sm:$0xf]
    %v119 = vld [vmem:[%s37 + $0x144] sm:$0xf]
    %v120 = vld [vmem:[%s37 + $0x148] sm:$0xf]
    %v121 = vld [vmem:[%s37 + $0x14c] sm:$0xf]
    %v122 = vld [vmem:[%s37 + $0x150] sm:$0xf]
    %v123 = vld [vmem:[%s37 + $0x154] sm:$0xf]
    %v124 = vld [vmem:[%s37 + $0x158] sm:$0xf]
    %v125 = vld [vmem:[%s37 + $0x15c] sm:$0xf]
    %v126 = vld [vmem:[%s37 + $0x160] sm:$0xf]
    %v127 = vld [vmem:[%s37 + $0x164] sm:$0xf]
    %v128 = vld [vmem:[%s37 + $0x168] sm:$0xf]
    %v129 = vld [vmem:[%s37 + $0x16c] sm:$0xf]
    %v130 = vld [vmem:[%s37 + $0x170] sm:$0xf]
    %v131 = vld [vmem:[%s37 + $0x174] sm:$0xf]
    %v132 = vld [vmem:[%s37 + $0x178] sm:$0xf]
    %v133 = vld [vmem:[%s37 + $0x17c] sm:$0xf]
    %v134 = vld [vmem:[%s37 + $0x180] sm:$0xf]
    %v135 = vld [vmem:[%s37 + $0x184] sm:$0xf]
    %v136 = vld [vmem:[%s37 + $0x188] sm:$0xf]
    %v137 = vld [vmem:[%s37 + $0x18c] sm:$0xf]
    %v138 = vld [vmem:[%s37 + $0x190] sm:$0xf]
    %v139 = vld [vmem:[%s37 + $0x194] sm:$0xf]
    %v140 = vld [vmem:[%s37 + $0x198] sm:$0xf]
    %v141 = vld [vmem:[%s37 + $0x19c] sm:$0xf]
    %v142 = vld [vmem:[%s37 + $0x1a0] sm:$0xf]
    %v143 = vld [vmem:[%s37 + $0x1a4] sm:$0xf]
    %v144 = vld [vmem:[%s37 + $0x1a8] sm:$0xf]
    %v145 = vld [vmem:[%s37 + $0x1ac] sm:$0xf]
    %v146 = vld [vmem:[%s37 + $0x1b0] sm:$0xf]
    %v147 = vld [vmem:[%s37 + $0x1b4] sm:$0xf]
    %v148 = vld [vmem:[%s37 + $0x1b8] sm:$0xf]
    %v149 = vld [vmem:[%s37 + $0x1bc] sm:$0xf]
    %v150 = vld [vmem:[%s37 + $0x1c0] sm:$0xf]
    %v151 = vld [vmem:[%s37 + $0x1c4] sm:$0xf]
    %v152 = vld [vmem:[%s37 + $0x1c8] sm:$0xf]
    %v153 = vld [vmem:[%s37 + $0x1cc] sm:$0xf]
    %v154 = vld [vmem:[%s37 + $0x1d0] sm:$0xf]
    %v155 = vld [vmem:[%s37 + $0x1d4] sm:$0xf]
    %v156 = vld [vmem:[%s37 + $0x1d8] sm:$0xf]
    %v157 = vld [vmem:[%s37 + $0x1dc] sm:$0xf]
    %v158 = vld [vmem:[%s37 + $0x1e0] sm:$0xf]
    %v159 = vld [vmem:[%s37 + $0x1e4] sm:$0xf]
    %v160 = vld [vmem:[%s37 + $0x1e8] sm:$0xf]
    %v161 = vld [vmem:[%s37 + $0x1ec] sm:$0xf]
    %v162 = vld [vmem:[%s37 + $0x1f0] sm:$0xf]
    %v163 = vld [vmem:[%s37 + $0x1f4] sm:$0xf]
    %v164 = vld [vmem:[%s37 + $0x1f8] sm:$0xf]
    %v165 = vld [vmem:[%s37 + $0x1fc] sm:$0xf]
    %v166 = vld [vmem:[#allocation2] sm:$0xff]
    %v167 = vld [vmem:[#allocation2 + $0x8] sm:$0xff]
    %v168 = vld [vmem:[%s1] sm:$0xff]
    %v169 = vld [vmem:[%s1 + $0x8] sm:$0xff]
    %v170 = vld [vmem:[%s1 + $0x10] sm:$0xff]
    %v171 = vld [vmem:[%s1 + $0x18] sm:$0xff]
    %v172 = vld [vmem:[%s1 + $0x20] sm:$0xff]
    %v173 = vld [vmem:[%s1 + $0x28] sm:$0xff]
    %v174 = vld [vmem:[%s1 + $0x30] sm:$0xff]
    %v175 = vld [vmem:[%s1 + $0x38] sm:$0xff]
    %v184 = vunpack.c.l.b16 %v168
    %v185 = vunpack.c.h.b16 %v168
    %v186 = vunpack.c.l.b16 %v169
    %v187 = vunpack.c.h.b16 %v169
    %v188 = vunpack.c.l.b16 %v170
    %v189 = vunpack.c.h.b16 %v170
    %v190 = vunpack.c.l.b16 %v171
    %v191 = vunpack.c.h.b16 %v171
    %v192 = vunpack.c.l.b16 %v172
    %v193 = vunpack.c.h.b16 %v172
    %v194 = vunpack.c.l.b16 %v173
    %v195 = vunpack.c.h.b16 %v173
    %v196 = vunpack.c.l.b16 %v174
    %v197 = vunpack.c.h.b16 %v174
    %v198 = vunpack.c.l.b16 %v175
    %v199 = vunpack.c.h.b16 %v175
    %v200 = vpack.c.b16 %v192, %v184
    %v201 = vpack.c.b16 %v193, %v185
    %v202 = vpack.c.b16 %v194, %v186
    %v203 = vpack.c.b16 %v195, %v187
    %v204 = vpack.c.b16 %v196, %v188
    %v205 = vpack.c.b16 %v197, %v189
    %v206 = vpack.c.b16 %v198, %v190
    %v207 = vpack.c.b16 %v199, %v191
    %v344 = vunpack.c.l.b16 %v38
    %v345 = vunpack.c.l.b16 %v39
    %v346 = vunpack.c.l.b16 %v40
    %v347 = vunpack.c.l.b16 %v41
    %v348 = vunpack.c.l.b16 %v42
    %v349 = vunpack.c.l.b16 %v43
    %v350 = vunpack.c.l.b16 %v44
    %v351 = vunpack.c.l.b16 %v45
    %v352 = vunpack.c.l.b16 %v46
    %v353 = vunpack.c.l.b16 %v47
    %v354 = vunpack.c.l.b16 %v48
    %v355 = vunpack.c.l.b16 %v49
    %v356 = vunpack.c.l.b16 %v50
    %v357 = vunpack.c.l.b16 %v51
    %v358 = vunpack.c.l.b16 %v52
    %v359 = vunpack.c.l.b16 %v53
    %v360 = vunpack.c.l.b16 %v54
    %v361 = vunpack.c.l.b16 %v55
    %v362 = vunpack.c.l.b16 %v56
    %v363 = vunpack.c.l.b16 %v57
    %v364 = vunpack.c.l.b16 %v58
    %v365 = vunpack.c.l.b16 %v59
    %v366 = vunpack.c.l.b16 %v60
    %v367 = vunpack.c.l.b16 %v61
    %v368 = vunpack.c.l.b16 %v62
    %v369 = vunpack.c.l.b16 %v63
    %v370 = vunpack.c.l.b16 %v64
    %v371 = vunpack.c.l.b16 %v65
    %v372 = vunpack.c.l.b16 %v66
    %v373 = vunpack.c.l.b16 %v67
    %v374 = vunpack.c.l.b16 %v68
    %v375 = vunpack.c.l.b16 %v69
    %v376 = vunpack.c.l.b16 %v70
    %v377 = vunpack.c.l.b16 %v71
    %v378 = vunpack.c.l.b16 %v72
    %v379 = vunpack.c.l.b16 %v73
    %v380 = vunpack.c.l.b16 %v74
    %v381 = vunpack.c.l.b16 %v75
    %v382 = vunpack.c.l.b16 %v76
    %v383 = vunpack.c.l.b16 %v77
    %v384 = vunpack.c.l.b16 %v78
    %v385 = vunpack.c.l.b16 %v79
    %v386 = vunpack.c.l.b16 %v80
    %v387 = vunpack.c.l.b16 %v81
    %v388 = vunpack.c.l.b16 %v82
    %v389 = vunpack.c.l.b16 %v83
    %v390 = vunpack.c.l.b16 %v84
    %v391 = vunpack.c.l.b16 %v85
    %v392 = vunpack.c.l.b16 %v86
    %v393 = vunpack.c.l.b16 %v87
    %v394 = vunpack.c.l.b16 %v88
    %v395 = vunpack.c.l.b16 %v89
    %v396 = vunpack.c.l.b16 %v90
    %v397 = vunpack.c.l.b16 %v91
    %v398 = vunpack.c.l.b16 %v92
    %v399 = vunpack.c.l.b16 %v93
    %v400 = vunpack.c.l.b16 %v94
    %v401 = vunpack.c.l.b16 %v95
    %v402 = vunpack.c.l.b16 %v96
    %v403 = vunpack.c.l.b16 %v97
    %v404 = vunpack.c.l.b16 %v98
    %v405 = vunpack.c.l.b16 %v99
    %v406 = vunpack.c.l.b16 %v100
    %v407 = vunpack.c.l.b16 %v101
    %v408 = vunpack.c.l.b16 %v102
    %v409 = vunpack.c.l.b16 %v103
    %v410 = vunpack.c.l.b16 %v104
    %v411 = vunpack.c.l.b16 %v105
    %v412 = vunpack.c.l.b16 %v106
    %v413 = vunpack.c.l.b16 %v107
    %v414 = vunpack.c.l.b16 %v108
    %v415 = vunpack.c.l.b16 %v109
    %v416 = vunpack.c.l.b16 %v110
    %v417 = vunpack.c.l.b16 %v111
    %v418 = vunpack.c.l.b16 %v112
    %v419 = vunpack.c.l.b16 %v113
    %v420 = vunpack.c.l.b16 %v114
    %v421 = vunpack.c.l.b16 %v115
    %v422 = vunpack.c.l.b16 %v116
    %v423 = vunpack.c.l.b16 %v117
    %v424 = vunpack.c.l.b16 %v118
    %v425 = vunpack.c.l.b16 %v119
    %v426 = vunpack.c.l.b16 %v120
    %v427 = vunpack.c.l.b16 %v121
    %v428 = vunpack.c.l.b16 %v122
    %v429 = vunpack.c.l.b16 %v123
    %v430 = vunpack.c.l.b16 %v124
    %v431 = vunpack.c.l.b16 %v125
    %v432 = vunpack.c.l.b16 %v126
    %v433 = vunpack.c.l.b16 %v127
    %v434 = vunpack.c.l.b16 %v128
    %v435 = vunpack.c.l.b16 %v129
    %v436 = vunpack.c.l.b16 %v130
    %v437 = vunpack.c.l.b16 %v131
    %v438 = vunpack.c.l.b16 %v132
    %v439 = vunpack.c.l.b16 %v133
    %v440 = vunpack.c.l.b16 %v134
    %v441 = vunpack.c.l.b16 %v135
    %v442 = vunpack.c.l.b16 %v136
    %v443 = vunpack.c.l.b16 %v137
    %v444 = vunpack.c.l.b16 %v138
    %v445 = vunpack.c.l.b16 %v139
    %v446 = vunpack.c.l.b16 %v140
    %v447 = vunpack.c.l.b16 %v141
    %v448 = vunpack.c.l.b16 %v142
    %v449 = vunpack.c.l.b16 %v143
    %v450 = vunpack.c.l.b16 %v144
    %v451 = vunpack.c.l.b16 %v145
    %v452 = vunpack.c.l.b16 %v146
    %v453 = vunpack.c.l.b16 %v147
    %v454 = vunpack.c.l.b16 %v148
    %v455 = vunpack.c.l.b16 %v149
    %v456 = vunpack.c.l.b16 %v150
    %v457 = vunpack.c.l.b16 %v151
    %v458 = vunpack.c.l.b16 %v152
    %v459 = vunpack.c.l.b16 %v153
    %v460 = vunpack.c.l.b16 %v154
    %v461 = vunpack.c.l.b16 %v155
    %v462 = vunpack.c.l.b16 %v156
    %v463 = vunpack.c.l.b16 %v157
    %v464 = vunpack.c.l.b16 %v158
    %v465 = vunpack.c.l.b16 %v159
    %v466 = vunpack.c.l.b16 %v160
    %v467 = vunpack.c.l.b16 %v161
    %v468 = vunpack.c.l.b16 %v162
    %v469 = vunpack.c.l.b16 %v163
    %v470 = vunpack.c.l.b16 %v164
    %v471 = vunpack.c.l.b16 %v165
    %v472 = vpack.c.b16 %v345, %v344
    %v473 = vpack.c.b16 %v347, %v346
    %v474 = vpack.c.b16 %v349, %v348
    %v475 = vpack.c.b16 %v351, %v350
    %v476 = vpack.c.b16 %v353, %v352
    %v477 = vpack.c.b16 %v355, %v354
    %v478 = vpack.c.b16 %v357, %v356
    %v479 = vpack.c.b16 %v359, %v358
    %v480 = vpack.c.b16 %v361, %v360
    %v481 = vpack.c.b16 %v363, %v362
    %v482 = vpack.c.b16 %v365, %v364
    %v483 = vpack.c.b16 %v367, %v366
    %v484 = vpack.c.b16 %v369, %v368
    %v485 = vpack.c.b16 %v371, %v370
    %v486 = vpack.c.b16 %v373, %v372
    %v487 = vpack.c.b16 %v375, %v374
    %v488 = vpack.c.b16 %v377, %v376
    %v489 = vpack.c.b16 %v379, %v378
    %v490 = vpack.c.b16 %v381, %v380
    %v491 = vpack.c.b16 %v383, %v382
    %v492 = vpack.c.b16 %v385, %v384
    %v493 = vpack.c.b16 %v387, %v386
    %v494 = vpack.c.b16 %v389, %v388
    %v495 = vpack.c.b16 %v391, %v390
    %v496 = vpack.c.b16 %v393, %v392
    %v497 = vpack.c.b16 %v395, %v394
    %v498 = vpack.c.b16 %v397, %v396
    %v499 = vpack.c.b16 %v399, %v398
    %v500 = vpack.c.b16 %v401, %v400
    %v501 = vpack.c.b16 %v403, %v402
    %v502 = vpack.c.b16 %v405, %v404
    %v503 = vpack.c.b16 %v407, %v406
    %v504 = vpack.c.b16 %v409, %v408
    %v505 = vpack.c.b16 %v411, %v410
    %v506 = vpack.c.b16 %v413, %v412
    %v507 = vpack.c.b16 %v415, %v414
    %v508 = vpack.c.b16 %v417, %v416
    %v509 = vpack.c.b16 %v419, %v418
    %v510 = vpack.c.b16 %v421, %v420
    %v511 = vpack.c.b16 %v423, %v422
    %v512 = vpack.c.b16 %v425, %v424
    %v513 = vpack.c.b16 %v427, %v426
    %v514 = vpack.c.b16 %v429, %v428
    %v515 = vpack.c.b16 %v431, %v430
    %v516 = vpack.c.b16 %v433, %v432
    %v517 = vpack.c.b16 %v435, %v434
    %v518 = vpack.c.b16 %v437, %v436
    %v519 = vpack.c.b16 %v439, %v438
    %v520 = vpack.c.b16 %v441, %v440
    %v521 = vpack.c.b16 %v443, %v442
    %v522 = vpack.c.b16 %v445, %v444
    %v523 = vpack.c.b16 %v447, %v446
    %v524 = vpack.c.b16 %v449, %v448
    %v525 = vpack.c.b16 %v451, %v450
    %v526 = vpack.c.b16 %v453, %v452
    %v527 = vpack.c.b16 %v455, %v454
    %v528 = vpack.c.b16 %v457, %v456
    %v529 = vpack.c.b16 %v459, %v458
    %v530 = vpack.c.b16 %v461, %v460
    %v531 = vpack.c.b16 %v463, %v462
    %v532 = vpack.c.b16 %v465, %v464
    %v533 = vpack.c.b16 %v467, %v466
    %v534 = vpack.c.b16 %v469, %v468
    %v535 = vpack.c.b16 %v471, %v470
    %600 = vmatprep.subr.bf16.mxu0 0
    %601 = vmatpush1.bf16.msra.mxu0 %v479
    %602 = vmatprep.subr.bf16.mxu0 0
    %603 = vmatpush1.bf16.msra.mxu0 %v478
    %604 = vmatprep.subr.bf16.mxu0 0
    %605 = vmatpush1.bf16.msra.mxu0 %v477
    %606 = vmatprep.subr.bf16.mxu0 0
    %607 = vmatpush1.bf16.msra.mxu0 %v476
    %608 = vmatprep.subr.bf16.mxu0 0
    %609 = vmatpush1.bf16.msra.mxu0 %v475
    %610 = vmatprep.subr.bf16.mxu0 0
    %611 = vmatpush1.bf16.msra.mxu0 %v474
    %612 = vmatprep.subr.bf16.mxu0 0
    %613 = vmatpush1.bf16.msra.mxu0 %v473
    %614 = vmatprep.subr.bf16.mxu0 0
    %615 = vmatpush1.bf16.msra.mxu0 %v472
    %616 = vmatprep.subr.bf16.mxu0 0
    %617 = vmatpush2.bf16.msra.mxu0 %v487
    %618 = vmatprep.subr.bf16.mxu0 0
    %619 = vmatpush2.bf16.msra.mxu0 %v486
    %620 = vmatprep.subr.bf16.mxu0 0
    %621 = vmatpush2.bf16.msra.mxu0 %v485
    %622 = vmatprep.subr.bf16.mxu0 0
    %623 = vmatpush2.bf16.msra.mxu0 %v484
    %624 = vmatprep.subr.bf16.mxu0 0
    %625 = vmatpush2.bf16.msra.mxu0 %v483
    %626 = vmatprep.subr.bf16.mxu0 0
    %627 = vmatpush2.bf16.msra.mxu0 %v482
    %628 = vmatprep.subr.bf16.mxu0 0
    %629 = vmatpush2.bf16.msra.mxu0 %v481
    %630 = vmatprep.subr.bf16.mxu0 0
    %631 = vmatpush2.bf16.msra.mxu0 %v480
    %632 = vmatprep.mubr.bf16.mxu0 %v201
    %633 = vmatmul.mubr.bf16.gmra.mxu0 %v200
    %v634 = vpop.f32.mrf.mxu0
    %v635 = vadd.f32 0.0, %v634
    %v636 = vpop.f32.mrf.mxu0
    %v637 = vpop.f32.mrf.mxu0
    %v638 = vadd.f32 0.0, %v637
    %v639 = vpop.f32.mrf.mxu0
    %640 = vdwg.mxu0
    %641 = vmatprep.subr.bf16.mxu0 0
    %642 = vmatpush1.bf16.msra.mxu0 %v495
    %643 = vmatprep.subr.bf16.mxu0 0
    %644 = vmatpush1.bf16.msra.mxu0 %v494
    %645 = vmatprep.subr.bf16.mxu0 0
    %646 = vmatpush1.bf16.msra.mxu0 %v493
    %647 = vmatprep.subr.bf16.mxu0 0
    %648 = vmatpush1.bf16.msra.mxu0 %v492
    %649 = vmatprep.subr.bf16.mxu0 0
    %650 = vmatpush1.bf16.msra.mxu0 %v491
    %651 = vmatprep.subr.bf16.mxu0 0
    %652 = vmatpush1.bf16.msra.mxu0 %v490
    %653 = vmatprep.subr.bf16.mxu0 0
    %654 = vmatpush1.bf16.msra.mxu0 %v489
    %655 = vmatprep.subr.bf16.mxu0 0
    %656 = vmatpush1.bf16.msra.mxu0 %v488
    %657 = vmatprep.subr.bf16.mxu0 0
    %658 = vmatpush2.bf16.msra.mxu0 %v503
    %659 = vmatprep.subr.bf16.mxu0 0
    %660 = vmatpush2.bf16.msra.mxu0 %v502
    %661 = vmatprep.subr.bf16.mxu0 0
    %662 = vmatpush2.bf16.msra.mxu0 %v501
    %663 = vmatprep.subr.bf16.mxu0 0
    %664 = vmatpush2.bf16.msra.mxu0 %v500
    %665 = vmatprep.subr.bf16.mxu0 0
    %666 = vmatpush2.bf16.msra.mxu0 %v499
    %667 = vmatprep.subr.bf16.mxu0 0
    %668 = vmatpush2.bf16.msra.mxu0 %v498
    %669 = vmatprep.subr.bf16.mxu0 0
    %670 = vmatpush2.bf16.msra.mxu0 %v497
    %671 = vmatprep.subr.bf16.mxu0 0
    %672 = vmatpush2.bf16.msra.mxu0 %v496
    %673 = vmatprep.mubr.bf16.mxu0 %v203
    %674 = vmatmul.mubr.bf16.gmra.mxu0 %v202
    %v675 = vpop.f32.mrf.mxu0
    %v676 = vadd.f32 %v635, %v675
    %v677 = vpop.f32.mrf.mxu0
    %v678 = vpop.f32.mrf.mxu0
    %v679 = vadd.f32 %v638, %v678
    %v680 = vpop.f32.mrf.mxu0
    %681 = vdwg.mxu0
    %682 = vmatprep.subr.bf16.mxu0 0
    %683 = vmatpush1.bf16.msra.mxu0 %v511
    %684 = vmatprep.subr.bf16.mxu0 0
    %685 = vmatpush1.bf16.msra.mxu0 %v510
    %686 = vmatprep.subr.bf16.mxu0 0
    %687 = vmatpush1.bf16.msra.mxu0 %v509
    %688 = vmatprep.subr.bf16.mxu0 0
    %689 = vmatpush1.bf16.msra.mxu0 %v508
    %690 = vmatprep.subr.bf16.mxu0 0
    %691 = vmatpush1.bf16.msra.mxu0 %v507
    %692 = vmatprep.subr.bf16.mxu0 0
    %693 = vmatpush1.bf16.msra.mxu0 %v506
    %694 = vmatprep.subr.bf16.mxu0 0
    %695 = vmatpush1.bf16.msra.mxu0 %v505
    %696 = vmatprep.subr.bf16.mxu0 0
    %697 = vmatpush1.bf16.msra.mxu0 %v504
    %698 = vmatprep.subr.bf16.mxu0 0
    %699 = vmatpush2.bf16.msra.mxu0 %v519
    %700 = vmatprep.subr.bf16.mxu0 0
    %701 = vmatpush2.bf16.msra.mxu0 %v518
    %702 = vmatprep.subr.bf16.mxu0 0
    %703 = vmatpush2.bf16.msra.mxu0 %v517
    %704 = vmatprep.subr.bf16.mxu0 0
    %705 = vmatpush2.bf16.msra.mxu0 %v516
    %706 = vmatprep.subr.bf16.mxu0 0
    %707 = vmatpush2.bf16.msra.mxu0 %v515
    %708 = vmatprep.subr.bf16.mxu0 0
    %709 = vmatpush2.bf16.msra.mxu0 %v514
    %710 = vmatprep.subr.bf16.mxu0 0
    %711 = vmatpush2.bf16.msra.mxu0 %v513
    %712 = vmatprep.subr.bf16.mxu0 0
    %713 = vmatpush2.bf16.msra.mxu0 %v512
    %714 = vmatprep.mubr.bf16.mxu0 %v205
    %715 = vmatmul.mubr.bf16.gmra.mxu0 %v204
    %v716 = vpop.f32.mrf.mxu0
    %v717 = vadd.f32 %v676, %v716
    %v718 = vpop.f32.mrf.mxu0
    %v719 = vpop.f32.mrf.mxu0
    %v720 = vadd.f32 %v679, %v719
    %v721 = vpop.f32.mrf.mxu0
    %722 = vdwg.mxu0
    %723 = vmatprep.subr.bf16.mxu0 0
    %724 = vmatpush1.bf16.msra.mxu0 %v527
    %725 = vmatprep.subr.bf16.mxu0 0
    %726 = vmatpush1.bf16.msra.mxu0 %v526
    %727 = vmatprep.subr.bf16.mxu0 0
    %728 = vmatpush1.bf16.msra.mxu0 %v525
    %729 = vmatprep.subr.bf16.mxu0 0
    %730 = vmatpush1.bf16.msra.mxu0 %v524
    %731 = vmatprep.subr.bf16.mxu0 0
    %732 = vmatpush1.bf16.msra.mxu0 %v523
    %733 = vmatprep.subr.bf16.mxu0 0
    %734 = vmatpush1.bf16.msra.mxu0 %v522
    %735 = vmatprep.subr.bf16.mxu0 0
    %736 = vmatpush1.bf16.msra.mxu0 %v521
    %737 = vmatprep.subr.bf16.mxu0 0
    %738 = vmatpush1.bf16.msra.mxu0 %v520
    %739 = vmatprep.subr.bf16.mxu0 0
    %740 = vmatpush2.bf16.msra.mxu0 %v535
    %741 = vmatprep.subr.bf16.mxu0 0
    %742 = vmatpush2.bf16.msra.mxu0 %v534
    %743 = vmatprep.subr.bf16.mxu0 0
    %744 = vmatpush2.bf16.msra.mxu0 %v533
    %745 = vmatprep.subr.bf16.mxu0 0
    %746 = vmatpush2.bf16.msra.mxu0 %v532
    %747 = vmatprep.subr.bf16.mxu0 0
    %748 = vmatpush2.bf16.msra.mxu0 %v531
    %749 = vmatprep.subr.bf16.mxu0 0
    %750 = vmatpush2.bf16.msra.mxu0 %v530
    %751 = vmatprep.subr.bf16.mxu0 0
    %752 = vmatpush2.bf16.msra.mxu0 %v529
    %753 = vmatprep.subr.bf16.mxu0 0
    %754 = vmatpush2.bf16.msra.mxu0 %v528
    %755 = vmatprep.mubr.bf16.mxu0 %v207
    %756 = vmatmul.mubr.bf16.gmra.mxu0 %v206
    %v757 = vpop.f32.mrf.mxu0
    %v758 = vadd.f32 %v717, %v757
    %v759 = vpop.f32.mrf.mxu0
    %v760 = vpop.f32.mrf.mxu0
    %v761 = vadd.f32 %v720, %v760
    %v762 = vpop.f32.mrf.mxu0
    %763 = vdwg.mxu0
    %v764 = vadd.f32 %v166, %v758
    %v765 = vadd.f32 %v167, %v761
    %vm766 = vcmask 64512
    %767 = vst.msk [vmem:[#allocation2] sm:$0xff] %vm766, %v764
    %768 = vst.msk [vmem:[#allocation2 + $0x8] sm:$0xff] %vm766, %v765
    // Predicated region
    $region30: #{tpu_custom_call.1} parent=1 // pred_check
      %p769 = pneg %p26
    $region31: #{tpu_custom_call.1} parent=1 // pred_check_branch
      %771 = sbr.rel (%p769) target = $region33
    $region32: #{tpu_custom_call.1} parent=1 // pred_region
      %v772 = vld [vmem:[#allocation2] sm:$0xff]
      %v773 = vld [vmem:[#allocation2 + $0x8] sm:$0xff]
      %v774 = vld [vmem:[%s3] sm:$0x1]
      %v776 = vlaneseq
      %v777 = vshrl.u32 %v776, 7
      %v778 = vsub.s32 0, %v777
      %v779 = vrot.slane %v774, %v778
      %v781 = vadd.f32 %v772, %v779
      %v782 = vadd.f32 %v773, %v779
      %s783 = sld [smem:[#allocation3]]
      %vm784 = vcmp.ge.f32.partialorder %v781, 0.0
      %vm785 = vcmp.ge.f32.partialorder %v782, 0.0
      %v786 = vstv %s783
      %v787 = vmul.f32 %v786, %v781
      %v788 = vmul.f32 %v786, %v782
      %v789 = vsel %vm784, %v781, %v787
      %v790 = vsel %vm785, %v782, %v788
      %v791 = vld [vmem:[%s4] sm:$0x1]
      %793 = vset.pattern.permute.xlu0 0
      %794 = vperm.xlu0 %793, %v789
      %v795 = vpop.permute.xlu0 %794
      %798 = vset.pattern.permute.xlu0 0
      %799 = vperm.xlu0 %798, %v790
      %v800 = vpop.permute.xlu0 %799
      %v802 = vlaneseq
      %v803 = vshrl.u32 %v802, 7
      %v804 = vsub.s32 0, %v803
      %v805 = vrot.slane %v791, %v804
      %v806 = vmul.f32 %v795, %v805
      %v807 = vmul.f32 %v800, %v805
      %v808 = vld [vmem:[%s4 + $0x1] sm:$0x1]
      %809 = vset.pattern.permute.xlu0 1
      %810 = vperm.xlu0 %809, %v789
      %v811 = vpop.permute.xlu0 %810
      %813 = vset.pattern.permute.xlu0 1
      %814 = vperm.xlu0 %813, %v790
      %v815 = vpop.permute.xlu0 %814
      %v817 = vlaneseq
      %v818 = vshrl.u32 %v817, 7
      %v819 = vsub.s32 0, %v818
      %v820 = vrot.slane %v808, %v819
      %v821 = vmul.f32 %v811, %v820
      %v822 = vmul.f32 %v815, %v820
      %v823 = vadd.f32 %v806, %v821
      %v824 = vadd.f32 %v807, %v822
      %v825 = vld [vmem:[%s5] sm:$0x1]
      %v827 = vlaneseq
      %v828 = vshrl.u32 %v827, 7
      %v829 = vsub.s32 0, %v828
      %v830 = vrot.slane %v825, %v829
      %v832 = vadd.f32 %v823, %v830
      %v833 = vadd.f32 %v824, %v830
      %v834 = vlaneseq
      %v835 = vand.u32 %v834, 127
      %vm836 = vcmp.lt.s32.totalorder %v835, 10
      %v837 = vsel %vm836, %v832, -inf
      %v838 = vsel %vm836, %v833, -inf
      %839 = vmax.xlane.f32.xlu0 %v837
      %v840 = vpop.xlane.xlu0 %839
      %841 = vmax.xlane.f32.xlu0 %v838
      %v842 = vpop.xlane.xlu0 %841
      %v843 = vsub.f32 %v837, %v840
      %v844 = vsub.f32 %v838, %v842
      %v845 = vmul.f32 %v843, 1.442695
      %v846 = vpow.pop %v845
      %v847 = vmul.f32 %v844, 1.442695
      %v848 = vpow.pop %v847
      %849 = vadd.xlane.f32.xlu0 %v846
      %v850 = vpop.xlane.xlu0 %849
      %851 = vadd.xlane.f32.xlu0 %v848
      %v852 = vpop.xlane.xlu0 %851
      %v853 = vlog2.pop %v850
      %v854 = vmul.f32 %v853, 0.6931472
      %v855 = vlog2.pop %v852
      %v856 = vmul.f32 %v855, 0.6931472
      %v857 = vsub.f32 %v843, %v854
      %v858 = vsub.f32 %v844, %v856
      %859 = vst [vmem:[#allocation4] sm:$0xff] %v857
      %860 = vst [vmem:[#allocation4 + $0x8] sm:$0xff] %v858
    $region33: #{tpu_custom_call.1} parent=1 // pred_fallthru
      _
    // Predicated region
    $region34: #{tpu_custom_call.1} parent=1 // pred_check
      _
    $region35: #{tpu_custom_call.1} parent=1 // pred_check_branch
      %862 = sbr.rel (0) target = $region37
    $region36: #{tpu_custom_call.1} parent=1 // pred_region
      %s864 = ssub.s32 256, 256
      %865 = vsyncadd [#allocation5], %s864
      %s866 = sshll.u32 [#allocation4], 4
      %s867 = int_to_ptr.vmem [resolvable:$true] %s866
      %872 = dma.vmem_to_hbm [thread:$0]  %s867, 256, %s6, [#allocation5], 128, 128, 8
    $region37: #{tpu_custom_call.1} parent=1 // pred_fallthru
      _
    // Predicated region
    $region38: #{tpu_custom_call.1} parent=1 // pred_check
      _
    $region39: #{tpu_custom_call.1} parent=1 // pred_check_branch
      %874 = sbr.rel (0) target = $region41
    $region40: #{tpu_custom_call.1} parent=1 // pred_region
      %875 = dma.done [#allocation5], 256
    $region41: #{tpu_custom_call.1} parent=1 // pred_fallthru
      _
    %876 = vsyncpa [#allocation5], 1

</llo_original>
